<compile_context>
chip_gen: v6e
topology: v6e:2x2x1
jax: 0.10.0
libtpu: 0.0.40
codegen_flags: <defaults>
</compile_context>

<pallas_src>
import jax
import jax.numpy as jnp
from jax import lax
from jax.experimental import pallas as pl
from jax.experimental.pallas import tpu as pltpu


_NUM_CORE_SPLITS = 2  # leading "parallel" grid axis; uses both v7x TCs, harmless on 1-TC chips


def _vmem_capacity_bytes():
    try:
        return int(pltpu.get_tpu_info().vmem_capacity_bytes)
    except Exception:
        return 64 * 1024 * 1024  # conservative (v7x-sized) fallback


def _make_sse_kernel(tile_n, chunk, f_lanes, rows_total, blocks_per_core, needs_mask):
    """SSE accumulation kernel.

    tile_n          : rows per input block (multiple of `chunk`)
    chunk           : rows per inner sub-chunk (bounds elementwise temporaries)
    f_lanes         : lane width of the packed rows
    rows_total      : true number of valid packed rows (static)
    blocks_per_core : row-blocks handled per core-split (static)
    needs_mask      : statically True iff partial / dead blocks exist
    """
    num_chunks = tile_n // chunk
    assert num_chunks * chunk == tile_n

    def kernel(out_ref, tgt_ref, sse_ref):
        c = pl.program_id(0)          # core split
        i = pl.program_id(1)          # reduction step

        @pl.when(i == 0)
        def _():
            sse_ref[...] = jnp.zeros_like(sse_ref)

        # Unclamped global packed-row offset of this block (used by the mask,
        # so clamped/dead blocks contribute exactly zero).
        row0 = (c * blocks_per_core + i) * tile_n

        def body(j, carry):
            r = pl.multiple_of(j * chunk, chunk)
            a = out_ref[pl.ds(r, chunk), :].astype(jnp.float32)
            b = tgt_ref[pl.ds(r, chunk), :].astype(jnp.float32)
            d = a - b
            dd = d * d
            if needs_mask:
                rid = lax.broadcasted_iota(jnp.int32, (chunk, 1), 0) + (row0 + r)
                dd = jnp.where(rid < rows_total, dd, 0.0)
            if chunk % 8 == 0:
                # Fold rows onto the 8 sublanes (tiling-aligned reshape, VPU adds only).
                sse_ref[...] += jnp.sum(dd.reshape(chunk // 8, 8, f_lanes), axis=0)
            else:
                # Tiny-input fallback (chunk < 8 rows): accumulate into sublane 0.
                sse_ref[0:1, :] += jnp.sum(dd, axis=0, keepdims=True)
            return carry

        lax.fori_loop(0, num_chunks, body, 0, unroll=True)

    return kernel


@jax.jit
def weighted_rmse_loss(output, target, weights):
    """output, target: (B, T, F); weights: (F,). Returns scalar float32 loss."""
    B, T, F = output.shape
    assert target.shape == (B, T, F)
    assert weights.shape == (F,)
    N = B * T

    out2d = output.reshape(N, F)
    tgt2d = target.reshape(N, F)

    # ---- zero-copy lane packing of the feature axis (never pads the tensors) ----
    if F < 128 and 128 % F == 0 and N % (128 // F) == 0:
        groups = 128 // F          # feature-vectors per 128-lane row (free reshape)
        f_lanes = 128
    else:
        groups = 1                 # block last dim == full feature dim (no pad needed)
        f_lanes = F
    rows = N // groups
    out2d = out2d.reshape(rows, f_lanes)
    tgt2d = tgt2d.reshape(rows, f_lanes)
    itemsize = out2d.dtype.itemsize

    # ---- generation-aware tile sizing ----
    vmem_cap = _vmem_capacity_bytes()
    if vmem_cap >= 96 * 1024 * 1024:         # v5e / v6e: 128 MiB physical VMEM
        target_block_bytes = 8 * 1024 * 1024
        vmem_limit = 64 * 1024 * 1024
    else:                                     # v7x: 64 MiB physical VMEM
        target_block_bytes = 4 * 1024 * 1024
        vmem_limit = 40 * 1024 * 1024

    # Rows per input block (~target_block_bytes per buffer), multiple of 8.
    tile_cap_rows = max(8, (target_block_bytes // (f_lanes * itemsize)) // 8 * 8)
    # Inner sub-chunk: ~1/16 of the biggest block (bounds temps, <=16 unrolled iters).
    chunk = max(8, (tile_cap_rows // 16) // 8 * 8)
    tile_cap = max(chunk, (tile_cap_rows // chunk) * chunk)

    if rows >= 2 * chunk:
        per_split = -(-rows // _NUM_CORE_SPLITS)
        tile_n = min(tile_cap, -(-per_split // chunk) * chunk)   # multiple of chunk
    else:
        tile_n = rows            # full-dim block (allowed for any row count)
        chunk = rows

    blocks_total = -(-rows // tile_n)
    blocks_per_core = -(-blocks_total // _NUM_CORE_SPLITS)
    needs_mask = (blocks_per_core * _NUM_CORE_SPLITS != blocks_total) or (
        blocks_total * tile_n != rows)

    kernel = _make_sse_kernel(tile_n, chunk, f_lanes, rows, blocks_per_core, needs_mask)

    if blocks_per_core * _NUM_CORE_SPLITS == blocks_total:
        def in_idx(c, i):
            return (c * blocks_per_core + i, 0)
    else:
        def in_idx(c, i):  # clamp dead blocks to a valid address; mask zeroes them
            return (jnp.minimum(c * blocks_per_core + i, blocks_total - 1), 0)

    partial_sse = pl.pallas_call(
        kernel,
        out_shape=jax.ShapeDtypeStruct((_NUM_CORE_SPLITS * 8, f_lanes), jnp.float32),
        grid_spec=pltpu.PrefetchScalarGridSpec(
            num_scalar_prefetch=0,
            grid=(_NUM_CORE_SPLITS, blocks_per_core),
            in_specs=[
                pl.BlockSpec((tile_n, f_lanes), in_idx),
                pl.BlockSpec((tile_n, f_lanes), in_idx),
            ],
            # Per-core (8, f_lanes) SSE slab, resident across the reduction axis.
            out_specs=pl.BlockSpec((8, f_lanes), lambda c, i: (c, 0)),
        ),
        compiler_params=pltpu.CompilerParams(
            dimension_semantics=("parallel", "arbitrary"),
            vmem_limit_bytes=vmem_limit,
        ),
    )(out2d, tgt2d)
    # TODO(synk): optionally set pipeline_mode=pl.Buffered(3) on the two input
    # BlockSpecs if a v7x profile still shows exposed DMA at step boundaries.

    # ---- tiny finalize in plain JAX ----
    sse = jnp.sum(partial_sse, axis=0)                     # (f_lanes,)
    if groups > 1:
        sse = jnp.sum(sse.reshape(groups, F), axis=0)      # fold lane groups -> (F,)
    mse = sse / N
    rmse = jnp.sqrt(mse)
    return jnp.mean(rmse * weights.astype(jnp.float32))


def _reference(output, target, weights):
    se = (output - target) ** 2
    mse = se.mean(axis=1).mean(axis=0)
    rmse = jnp.sqrt(mse)
    return (rmse * weights).mean()


if __name__ == "__main__":
    key = jax.random.PRNGKey(0)
    k1, k2, k3 = jax.random.split(key, 3)

    B, T, F = 2, 8, 32
    output = jax.random.normal(k1, (B, T, F), dtype=jnp.float32)
    target = jax.random.normal(k2, (B, T, F), dtype=jnp.float32)
    # Deterministic "weights" parameter (shape (F,), positive).
    weights = jax.random.uniform(k3, (F,), dtype=jnp.float32) + 0.5

    loss = weighted_rmse_loss(output, target, weights)
    jax.block_until_ready(loss)

    ref = _reference(output, target, weights)
    assert jnp.allclose(loss, ref, rtol=1e-5, atol=1e-6), (loss, ref)

    print("KERNEL_OK")
</pallas_src>

<mosaic_0001>
module attributes {stable_mosaic.version = 11 : i64} {
  func.func @kernel(%arg0: i32, %arg1: i32, %arg2: memref<4x128xf32, #tpu.memory_space<vmem>>, %arg3: memref<4x128xf32, #tpu.memory_space<vmem>>, %arg4: memref<8x128xf32, #tpu.memory_space<vmem>>) attributes {dimension_semantics = [#tpu.dimension_semantics<parallel>, #tpu.dimension_semantics<arbitrary>], iteration_bounds = array<i64: 2, 1>, scalar_prefetch = 0 : i64, scratch_operands = 0 : i64, tpu.core_type = #tpu.core_type<tc>, window_params = [{transform_indices = @transform_0, window_bounds = array<i64: 4, 128>}, {transform_indices = @transform_1, window_bounds = array<i64: 4, 128>}, {transform_indices = @transform_2, window_bounds = array<i64: 8, 128>}]} {
    %c0_i32 = arith.constant 0 : i32
    %0 = arith.cmpi eq, %arg1, %c0_i32 : i32
    %1 = arith.extui %0 : i1 to i32
    %c0_i32_0 = arith.constant 0 : i32
    %2 = arith.cmpi ne, %1, %c0_i32_0 : i32
    scf.if %2 {
      %cst_11 = arith.constant 0.000000e+00 : f32
      %29 = vector.broadcast %cst_11 : f32 to vector<8x128xf32>
      %c0_12 = arith.constant 0 : index
      %c0_13 = arith.constant 0 : index
      %30 = vector.load %arg4[%c0_12, %c0_13] : memref<8x128xf32, #tpu.memory_space<vmem>>, vector<8x128xf32>
      tpu.vector_store %arg4[%c0_12, %c0_13], %29 {strides = array<i32>} : memref<8x128xf32, #tpu.memory_space<vmem>>, vector<8x128xf32>,
    } else {
    }
    %c1_i32 = arith.constant 1 : i32
    %3 = arith.muli %arg0, %c1_i32 : i32
    %4 = arith.addi %3, %arg1 : i32
    %c4_i32 = arith.constant 4 : i32
    %5 = arith.muli %4, %c4_i32 : i32
    %c0_i32_1 = arith.constant 0 : i32
    %c4_i32_2 = arith.constant 4 : i32
    %6 = arith.muli %c0_i32_1, %c4_i32_2 : i32
    %7 = tpu.assume_multiple %6, 4 : i32
    %8 = arith.index_cast %7 : i32 to index
    %c0 = arith.constant 0 : index
    %9 = vector.load %arg2[%8, %c0] : memref<4x128xf32, #tpu.memory_space<vmem>>, vector<4x128xf32>
    %10 = arith.index_cast %7 : i32 to index
    %c0_3 = arith.constant 0 : index
    %11 = vector.load %arg3[%10, %c0_3] : memref<4x128xf32, #tpu.memory_space<vmem>>, vector<4x128xf32>
    %12 = arith.subf %9, %11 : vector<4x128xf32>
    %13 = arith.mulf %12, %12 : vector<4x128xf32>
    %14 = tpu.iota {dimensions = array<i32: 0>} : vector<4x1xi32>
    %15 = arith.addi %5, %7 : i32
    %16 = vector.broadcast %15 : i32 to vector<4x1xi32>
    %17 = arith.addi %14, %16 : vector<4x1xi32>
    %c4_i32_4 = arith.constant 4 : i32
    %18 = vector.broadcast %c4_i32_4 : i32 to vector<4x1xi32>
    %19 = arith.cmpi slt, %17, %18 : vector<4x1xi32>
    %cst = arith.constant 0.000000e+00 : f32
    %20 = vector.shape_cast %19 : vector<4x1xi1> to vector<4x1xi1>
    %21 = vector.broadcast %20 : vector<4x1xi1> to vector<4x128xi1>
    %22 = vector.broadcast %cst : f32 to vector<4x128xf32>
    %23 = arith.select %21, %13, %22 : vector<4x128xi1>, vector<4x128xf32>
    %c0_5 = arith.constant 0 : index
    %c0_6 = arith.constant 0 : index
    %24 = vector.load %arg4[%c0_5, %c0_6] : memref<8x128xf32, #tpu.memory_space<vmem>>, vector<1x128xf32>
    %cst_7 = arith.constant dense<0.000000e+00> : vector<128xf32>
    %25 = vector.multi_reduction <add>, %23, %cst_7 [0] : vector<4x128xf32> to vector<128xf32>
    %26 = vector.shape_cast %25 : vector<128xf32> to vector<1x128xf32>
    %27 = arith.addf %24, %26 : vector<1x128xf32>
    %c0_8 = arith.constant 0 : index
    %c0_9 = arith.constant 0 : index
    %28 = vector.load %arg4[%c0_8, %c0_9] : memref<8x128xf32, #tpu.memory_space<vmem>>, vector<1x128xf32>
    tpu.vector_store %arg4[%c0_8, %c0_9], %27 {strides = array<i32>} : memref<8x128xf32, #tpu.memory_space<vmem>>, vector<1x128xf32>,
    %c1_i32_10 = arith.constant 1 : i32
    return
  }
  func.func @transform_0(%arg0: i32, %arg1: i32) -> (i32, i32) {
    %c1_i32 = arith.constant 1 : i32
    %0 = arith.muli %arg0, %c1_i32 : i32
    %1 = arith.addi %0, %arg1 : i32
    %c0_i32 = arith.constant 0 : i32
    %2 = arith.minsi %1, %c0_i32 : i32
    %c0_i32_0 = arith.constant 0 : i32
    %c0_i32_1 = arith.constant 0 : i32
    return %2, %c0_i32_0 : i32, i32
  }
  func.func @transform_1(%arg0: i32, %arg1: i32) -> (i32, i32) {
    %c1_i32 = arith.constant 1 : i32
    %0 = arith.muli %arg0, %c1_i32 : i32
    %1 = arith.addi %0, %arg1 : i32
    %c0_i32 = arith.constant 0 : i32
    %2 = arith.minsi %1, %c0_i32 : i32
    %c0_i32_0 = arith.constant 0 : i32
    %c0_i32_1 = arith.constant 0 : i32
    return %2, %c0_i32_0 : i32, i32
  }
  func.func @transform_2(%arg0: i32, %arg1: i32) -> (i32, i32) {
    %c0_i32 = arith.constant 0 : i32
    %c0_i32_0 = arith.constant 0 : i32
    return %arg0, %c0_i32 : i32, i32
  }
}

</mosaic_0001>

<llo_original>
// kernel: weighted_rmse_loss.1
$region0: #{weighted_rmse_loss.1}
  #allocation0 [shape = 'u32[]', space=smem, size = 0x4, offset = 0x4, fixed_abs, tag = 'smem constant byte address 0x4 - core index']
  #allocation1 [shape = 'u32[144,128]{1,0:T(1,128)}', space=vmem, size = 0x12000, scoped, tag = 'internal scratch']
  %s0 = inlined_call_operand.vmem [shape: f32[4,128], index: 0, kind: input, shape index: {}]
  %s1 = inlined_call_operand.vmem [shape: f32[4,128], index: 1, kind: input, shape index: {}]
  %s2 = inlined_call_operand.vmem [shape: f32[16,128], index: 2, kind: output, shape index: {}]
  %s3 = sld [smem:[#allocation0]]
  $region45: #{weighted_rmse_loss.1} parent=0
    _
  %s5 = ssub.s32 1, %s3
  %s6 = scalar_select 0, %s5, %s3
  loop: start=0, step=1, limit=4
  $region2: #{weighted_rmse_loss.1} parent=0 // loop_pre_header
    _
  $region3: #{weighted_rmse_loss.1} parent=0 // loop_header
    %s8 = sphi 0, %s12
    %p9 = scmp.ge.s32.totalorder %s8, 4
    %s15 = sphi 0, %s27
    %s16 = sphi 0, %s23
    %s17 = sphi 0, %s15
    %s18 = sphi 0, %s16
    %s19 = sphi 0, %s17
    %s20 = sphi 0, %s18
    %s36 = sphi 0, %s38
    %s39 = sphi 0, %s36
    %s40 = sphi 0, %s39
    %s56 = sphi 0, %s40
    %s68 = sphi 0, %s70
    %s71 = sphi 0, %s68
    %s72 = sphi 0, %s71
    %s88 = sphi 0, %s72
    %s94 = sphi 0, %s96
    %s97 = sphi 0, %s94
    %s98 = sphi 0, %s97
    %s114 = sphi 0, %s98
  $region4: #{weighted_rmse_loss.1} parent=0 // loop_header_branch
    %11 = sbr.rel (%p9) target = $region8
  $region5: #{weighted_rmse_loss.1} parent=0 // loop_body
    %s13 = ssub.s32 %s8, 1
    %s14 = ssub.s32 %s8, 2
    %s21 = sadd.s32 1, %s16
    %p22 = scmp.ge.s32.totalorder %s21, 1
    %s23 = scalar_select %p22, 0, %s21
    %s24 = sadd.s32 1, %s15
    %s25 = scalar_select %p22, %s24, %s15
    %p26 = scmp.ge.s32.totalorder %s25, 2
    %s27 = scalar_select %p26, 0, %s25
    %s28 = sadd.s32 %s15, %s16
    %p29 = scmp.lt.s32.totalorder %s28, 0
    %s30 = scalar_select %p29, %s28, 0
    %s31 = sadd.s32 %s27, %s23
    %p32 = scmp.lt.s32.totalorder %s31, 0
    %s33 = scalar_select %p32, %s31, 0
    %s34 = ssub.s32 %s30, %s33
    %p35 = scmp.eq.s32.totalorder %s34, 0
    %s37 = sadd.s32 %s36, 1
    %s38 = scalar_select %p35, %s36, %s37
    %p41 = pneg %p35
    %p42 = scmp.eq.s32.totalorder %s8, 1
    %p43 = por %p41, %p42
    %p44 = scmp.ne.s32.totalorder %s36, %s39
    %p45 = scmp.eq.s32.totalorder %s8, 0
    %p46 = por %p44, %p45
    %p47 = scmp.ne.s32.totalorder %s36, %s39
    %p48 = scmp.eq.s32.totalorder %s13, 1
    %p49 = por %p47, %p48
    %p50 = scmp.ne.s32.totalorder %s39, %s40
    %p51 = scmp.eq.s32.totalorder %s13, 0
    %p52 = por %p50, %p51
    %p53 = scmp.ne.s32.totalorder %s39, %s40
    %p54 = scmp.eq.s32.totalorder %s14, 1
    %p55 = por %p53, %p54
    %p57 = scmp.ne.s32.totalorder %s40, %s56
    %p58 = scmp.eq.s32.totalorder %s14, 0
    %p59 = por %p57, %p58
    %s60 = sadd.s32 %s15, %s16
    %p61 = scmp.lt.s32.totalorder %s60, 0
    %s62 = scalar_select %p61, %s60, 0
    %s63 = sadd.s32 %s27, %s23
    %p64 = scmp.lt.s32.totalorder %s63, 0
    %s65 = scalar_select %p64, %s63, 0
    %s66 = ssub.s32 %s62, %s65
    %p67 = scmp.eq.s32.totalorder %s66, 0
    %s69 = sadd.s32 %s68, 1
    %s70 = scalar_select %p67, %s68, %s69
    %p73 = pneg %p67
    %p74 = scmp.eq.s32.totalorder %s8, 1
    %p75 = por %p73, %p74
    %p76 = scmp.ne.s32.totalorder %s68, %s71
    %p77 = scmp.eq.s32.totalorder %s8, 0
    %p78 = por %p76, %p77
    %p79 = scmp.ne.s32.totalorder %s68, %s71
    %p80 = scmp.eq.s32.totalorder %s13, 1
    %p81 = por %p79, %p80
    %p82 = scmp.ne.s32.totalorder %s71, %s72
    %p83 = scmp.eq.s32.totalorder %s13, 0
    %p84 = por %p82, %p83
    %p85 = scmp.ne.s32.totalorder %s71, %s72
    %p86 = scmp.eq.s32.totalorder %s14, 1
    %p87 = por %p85, %p86
    %p89 = scmp.ne.s32.totalorder %s72, %s88
    %p90 = scmp.eq.s32.totalorder %s14, 0
    %p91 = por %p89, %p90
    %s92 = ssub.s32 %s15, %s27
    %p93 = scmp.eq.s32.totalorder %s92, 0
    %s95 = sadd.s32 %s94, 1
    %s96 = scalar_select %p93, %s94, %s95
    %p99 = pneg %p93
    %p100 = scmp.eq.s32.totalorder %s8, 1
    %p101 = por %p99, %p100
    %p102 = scmp.ne.s32.totalorder %s94, %s97
    %p103 = scmp.eq.s32.totalorder %s8, 0
    %p104 = por %p102, %p103
    %p105 = scmp.ne.s32.totalorder %s94, %s97
    %p106 = scmp.eq.s32.totalorder %s13, 1
    %p107 = por %p105, %p106
    %p108 = scmp.ne.s32.totalorder %s97, %s98
    %p109 = scmp.eq.s32.totalorder %s13, 0
    %p110 = por %p108, %p109
    %p111 = scmp.ne.s32.totalorder %s97, %s98
    %p112 = scmp.eq.s32.totalorder %s14, 1
    %p113 = por %p111, %p112
    %p115 = scmp.ne.s32.totalorder %s98, %s114
    %p116 = scmp.eq.s32.totalorder %s14, 0
    %p117 = por %p115, %p116
    %p118 = scmp.le.s32.totalorder 1, %s8
    %p119 = scmp.lt.s32.totalorder %s8, 3
    %p120 = pnand %p118, %p119
    %p121 = pneg %p120
    // Predicated region
    $region9: #{weighted_rmse_loss.1} parent=5 // pred_check
      _
    $region10: #{weighted_rmse_loss.1} parent=5 // pred_check_branch
      %123 = sbr.rel (%p120) target = $region12
    $region11: #{weighted_rmse_loss.1} parent=5 // pred_region
      %s124 = ssub.s32 %s8, 1
    $region12: #{weighted_rmse_loss.1} parent=5 // pred_fallthru
      _
    %p125 = scmp.lt.s32.totalorder %s8, 2
    // Predicated region
    $region13: #{weighted_rmse_loss.1} parent=5 // pred_check
      %p126 = pneg %p125
    $region14: #{weighted_rmse_loss.1} parent=5 // pred_check_branch
      %128 = sbr.rel (%p126) target = $region16
    $region15: #{weighted_rmse_loss.1} parent=5 // pred_region
      // Predicated region
      $region17: #{weighted_rmse_loss.1} parent=15 // pred_check
        %p129 = pneg %p46
      $region18: #{weighted_rmse_loss.1} parent=15 // pred_check_branch
        %131 = sbr.rel (%p129) target = $region20
      $region19: #{weighted_rmse_loss.1} parent=15 // pred_region
        %s132 = sadd.s32 %s15, %s16
        %p133 = scmp.lt.s32.totalorder %s132, 0
        %s134 = scalar_select %p133, %s132, 0
        %p135 = scmp.lt.s32.totalorder %s134, 0
        %s136 = scalar_select %p135, %s134, 0
        %s137 = smul.addr %s136, 4
        %s138 = scalar_lea.vmem %s0, %s137
        %s139 = sadd.s32 %s15, %s16
        %p140 = scmp.lt.s32.totalorder %s139, 0
        %s141 = scalar_select %p140, %s139, 0
      $region20: #{weighted_rmse_loss.1} parent=15 // pred_fallthru
        _
      // Predicated region
      $region21: #{weighted_rmse_loss.1} parent=15 // pred_check
        %p142 = pneg %p78
      $region22: #{weighted_rmse_loss.1} parent=15 // pred_check_branch
        %144 = sbr.rel (%p142) target = $region24
      $region23: #{weighted_rmse_loss.1} parent=15 // pred_region
        %s145 = sadd.s32 %s15, %s16
        %p146 = scmp.lt.s32.totalorder %s145, 0
        %s147 = scalar_select %p146, %s145, 0
        %p148 = scmp.lt.s32.totalorder %s147, 0
        %s149 = scalar_select %p148, %s147, 0
        %s150 = smul.addr %s149, 4
        %s151 = scalar_lea.vmem %s1, %s150
        %s152 = sadd.s32 %s15, %s16
        %p153 = scmp.lt.s32.totalorder %s152, 0
        %s154 = scalar_select %p153, %s152, 0
      $region24: #{weighted_rmse_loss.1} parent=15 // pred_fallthru
        _
    $region16: #{weighted_rmse_loss.1} parent=5 // pred_fallthru
      _
    %p155 = scmp.le.s32.totalorder 1, %s8
    %p156 = scmp.lt.s32.totalorder %s8, 3
    %p157 = pnand %p155, %p156
    %p158 = pneg %p157
    // Predicated region
    $region25: #{weighted_rmse_loss.1} parent=5 // pred_check
      _
    $region26: #{weighted_rmse_loss.1} parent=5 // pred_check_branch
      %160 = sbr.rel (%p157) target = $region28
    $region27: #{weighted_rmse_loss.1} parent=5 // pred_region
      %s161 = ssub.s32 %s8, 1
      %s162 = sadd.s32 %s17, %s18
      %p163 = scmp.lt.s32.totalorder %s162, 0
      %s164 = scalar_select %p163, %s162, 0
      %p165 = scmp.lt.s32.totalorder %s164, 0
      %s166 = scalar_select %p165, %s164, 0
      %s167 = smul.addr %s166, 4
      %s168 = scalar_lea.vmem %s0, %s167
      %p169 = pneg %p52
      %p170 = pneg %p49
      %s171 = sadd.s32 %s17, %s18
      %p172 = scmp.lt.s32.totalorder %s171, 0
      %s173 = scalar_select %p172, %s171, 0
      %p174 = scmp.lt.s32.totalorder %s173, 0
      %s175 = scalar_select %p174, %s173, 0
      %s176 = smul.addr %s175, 4
      %s177 = scalar_lea.vmem %s1, %s176
      %p178 = pneg %p84
      %p179 = pneg %p81
      %p180 = pneg %p110
      %p181 = pneg %p107
      %p182 = scmp.lt.s32.totalorder %s17, 1
      %s183 = scalar_select %p182, %s17, 1
      %s184 = smul.addr %s183, 8
      %s185 = scalar_lea.vmem %s2, %s184
      %s186 = sadd.s32 %s17, %s18
      %p187 = scmp.lt.s32.totalorder %s186, 0
      %s188 = scalar_select %p187, %s186, 0
      %p189 = scmp.lt.s32.totalorder %s188, 0
      %s190 = scalar_select %p189, %s188, 0
      %s191 = smul.addr %s190, 4
      %s192 = scalar_lea.vmem %s0, %s191
      %s193 = sadd.s32 %s17, %s18
      %p194 = scmp.lt.s32.totalorder %s193, 0
      %s195 = scalar_select %p194, %s193, 0
      %s196 = sadd.s32 %s17, %s18
      %p197 = scmp.lt.s32.totalorder %s196, 0
      %s198 = scalar_select %p197, %s196, 0
      %p199 = scmp.lt.s32.totalorder %s198, 0
      %s200 = scalar_select %p199, %s198, 0
      %s201 = smul.addr %s200, 4
      %s202 = scalar_lea.vmem %s1, %s201
      %s203 = sadd.s32 %s17, %s18
      %p204 = scmp.lt.s32.totalorder %s203, 0
      %s205 = scalar_select %p204, %s203, 0
      %p206 = scmp.lt.s32.totalorder %s17, 1
      %s207 = scalar_select %p206, %s17, 1
      %s208 = smul.addr %s207, 8
      %s209 = scalar_lea.vmem %s2, %s208
      %p210 = scmp.eq.s32.totalorder %s18, 0
      // Predicated region
      $region29: #{weighted_rmse_loss.1} parent=27 // pred_check
        %p211 = pneg %p210
      $region30: #{weighted_rmse_loss.1} parent=27 // pred_check_branch
        %213 = sbr.rel (%p211) target = $region32
      $region31: #{weighted_rmse_loss.1} parent=27 // pred_region
        %214 = vst [vmem:[%s209] sm:$0xff] 0.0
      $region32: #{weighted_rmse_loss.1} parent=27 // pred_fallthru
        _
      %s215 = sadd.s32 %s17, %s18
      %s216 = smul.u32 %s215, 4
      %v217 = vld [vmem:[%s192] sm:$0xf]
      %v218 = vld [vmem:[%s202] sm:$0xf]
      %v219 = vsub.f32 %v217, %v218
      %v220 = vmul.f32 %v219, %v219
      %v221 = vlaneseq
      %v222 = vshrl.u32 %v221, 7
      %s223 = sadd.s32 %s216, 0
      %v224 = vstv %s223
      %v225 = vadd.s32 %v222, %v224
      %vm226 = vcmp.lt.s32.totalorder %v225, 4
      %v227 = vsel %vm226, 1, 0
      %vm228 = vcmp.eq.s32.totalorder %v227, 1
      %v229 = vsel %vm228, %v220, 0.0
      %v230 = vld [vmem:[%s209] sm:$0x1]
      %vm231 = vcmask 1043456
      %v232 = vsel %vm231, %v229, 0.0
      %v233 = vrot.slane %v232, 4
      %v234 = vadd.f32 %v232, %v233
      %v235 = vrot.slane %v234, 2
      %v236 = vadd.f32 %v234, %v235
      %v237 = vrot.slane %v236, 1
      %v238 = vadd.f32 %v236, %v237
      %v239 = vadd.f32 %v230, %v238
      %240 = vst [vmem:[%s209] sm:$0x1] %v239
      %p241 = scmp.lt.s32.totalorder %s17, 1
      %s242 = scalar_select %p241, %s17, 1
      %s243 = smul.addr %s242, 8
      %s244 = scalar_lea.vmem %s2, %s243
      // Predicated region
      $region33: #{weighted_rmse_loss.1} parent=27 // pred_check
        %p245 = pneg %p107
      $region34: #{weighted_rmse_loss.1} parent=27 // pred_check_branch
        %247 = sbr.rel (%p245) target = $region36
      $region35: #{weighted_rmse_loss.1} parent=27 // pred_region
        _
      $region36: #{weighted_rmse_loss.1} parent=27 // pred_fallthru
        _
    $region28: #{weighted_rmse_loss.1} parent=5 // pred_fallthru
      _
    %p248 = scmp.le.s32.totalorder 2, %s8
    // Predicated region
    $region37: #{weighted_rmse_loss.1} parent=5 // pred_check
      %p249 = pneg %p248
    $region38: #{weighted_rmse_loss.1} parent=5 // pred_check_branch
      %251 = sbr.rel (%p249) target = $region40
    $region39: #{weighted_rmse_loss.1} parent=5 // pred_region
      %s252 = ssub.s32 %s8, 2
      // Predicated region
      $region41: #{weighted_rmse_loss.1} parent=39 // pred_check
        %p253 = pneg %p113
      $region42: #{weighted_rmse_loss.1} parent=39 // pred_check_branch
        %255 = sbr.rel (%p253) target = $region44
      $region43: #{weighted_rmse_loss.1} parent=39 // pred_region
        %p256 = scmp.lt.s32.totalorder %s19, 1
        %s257 = scalar_select %p256, %s19, 1
        %s258 = smul.addr %s257, 8
        %s259 = scalar_lea.vmem %s2, %s258
      $region44: #{weighted_rmse_loss.1} parent=39 // pred_fallthru
        _
    $region40: #{weighted_rmse_loss.1} parent=5 // pred_fallthru
      _
  $region6: #{weighted_rmse_loss.1} parent=0 // loop_footer
    %s12 = sadd.s32 1, %s8
  $region7: #{weighted_rmse_loss.1} parent=0 // loop_footer_branch
    %7 = sbr.rel target = $region3
  $region8: #{weighted_rmse_loss.1} parent=0 // loop_exit
    _

</llo_original>
